<compile_context>
chip_gen: v7x
topology: tpu7x:2x2x1
jax: 0.10.0
libtpu: 0.0.40
codegen_flags: <defaults>
</compile_context>

<pallas_src>
import functools

import jax
import jax.numpy as jnp
from jax import lax
from jax.experimental import pallas as pl
from jax.experimental.pallas import tpu as pltpu


# ---------------------------------------------------------------------------
# VMEM sizing
# ---------------------------------------------------------------------------
def _vmem_capacity_bytes() -> int:
    try:
        info = pltpu.get_tpu_info()
        cap = int(getattr(info, "vmem_capacity_bytes", 0))
        if cap > 0:
            return cap
    except Exception:
        pass
    return 64 * 1024 * 1024  # conservative default (v7x per-TensorCore VMEM)


# ---------------------------------------------------------------------------
# Kernels
# ---------------------------------------------------------------------------
def _center_kernel(x_ref, o_ref, *, inv_n: float):
    # Single-pass: full batch (N) on sublanes, one feature tile on lanes.
    x = x_ref[...]
    # Accumulate the batch sum in f32 without materializing an f32 copy of x.
    mean = jnp.sum(x, axis=0, keepdims=True, dtype=jnp.float32) * inv_n
    # Subtract in the input dtype (bf16 VPU on v6e/v7x; auto-promoted on v5e).
    o_ref[...] = (x - mean.astype(x.dtype)).astype(o_ref.dtype)


def _colsum_kernel(x_ref, s_ref, *, n_rows: int, tile_n: int):
    # Two-pass / pass 1: accumulate per-feature f32 sums over the N grid axis.
    i = pl.program_id(1)  # N (reduction) axis, last in grid

    @pl.when(i == 0)
    def _():
        s_ref[...] = jnp.zeros_like(s_ref)

    x = x_ref[...]
    # Mask rows past the end of the batch (ragged last N block reads garbage).
    row = lax.broadcasted_iota(jnp.int32, x.shape, 0)
    valid = n_rows - i * tile_n
    xm = jnp.where(row < valid, x, jnp.zeros_like(x))
    s_ref[...] += jnp.sum(xm, axis=0, keepdims=True, dtype=jnp.float32)


def _subtract_kernel(x_ref, s_ref, o_ref, *, inv_n: float):
    # Two-pass / pass 2: subtract the precomputed per-feature mean.
    x = x_ref[...]
    mean = s_ref[...] * inv_n
    o_ref[...] = (x - mean.astype(x.dtype)).astype(o_ref.dtype)


# ---------------------------------------------------------------------------
# Wrapper
# ---------------------------------------------------------------------------
def l2_center_norm(x: jax.Array, *, vmem_budget_bytes: int | None = None) -> jax.Array:
    """Pallas implementation of L2CenterNormLayer.forward (mean over dim 0)."""
    orig_shape = x.shape
    x2 = x.reshape(orig_shape[0], -1) if x.ndim != 2 else x
    N, D = x2.shape
    itemsize = jnp.dtype(x2.dtype).itemsize
    inv_n = 1.0 / N

    vmem_cap = _vmem_capacity_bytes()
    if vmem_budget_bytes is None:
        frac = 0.70 if vmem_cap <= (64 << 20) else 0.75
        vmem_budget_bytes = int(vmem_cap * frac)
    vmem_limit = max(int(min(vmem_cap - (8 << 20), vmem_cap * 0.92)), 32 << 20)

    lane_blocks = pl.cdiv(D, 128)
    # Per element of an (N, 128) full-batch column block: double-buffered
    # input + output plus small f32 working slack.
    per_elem_single = 4 * itemsize + 4
    col_block_bytes = N * 128 * per_elem_single

    if col_block_bytes <= vmem_budget_bytes:
        # ------------------- single pass: full batch per feature tile -------
        cap_blocks = max(1, vmem_budget_bytes // col_block_bytes)
        tile_blocks = min(lane_blocks, cap_blocks)
        if lane_blocks >= 2:
            # Guarantee >=2 feature steps so the parallel axis can shard
            # across the two TensorCores on v7x.
            tile_blocks = min(tile_blocks, pl.cdiv(lane_blocks, 2))

        if tile_blocks >= lane_blocks:
            # Whole array in one block: exact dims (no padded lanes at all).
            tile_d, grid = D, (1,)
        else:
            tile_d = 128 * tile_blocks
            grid = (pl.cdiv(D, tile_d),)  # last block may be ragged (masked)

        out = pl.pallas_call(
            functools.partial(_center_kernel, inv_n=inv_n),
            out_shape=jax.ShapeDtypeStruct((N, D), x2.dtype),
            grid_spec=pltpu.PrefetchScalarGridSpec(
                num_scalar_prefetch=0,
                grid=grid,
                in_specs=[pl.BlockSpec((N, tile_d), lambda j: (0, j))],
                out_specs=pl.BlockSpec((N, tile_d), lambda j: (0, j)),
            ),
            compiler_params=pltpu.CompilerParams(
                dimension_semantics=("parallel",),
                vmem_limit_bytes=vmem_limit,
            ),
            cost_estimate=pl.CostEstimate(
                flops=2 * N * D,
                transcendentals=0,
                bytes_accessed=2 * N * D * itemsize,
            ),
        )(x2)
    else:
        # ------------------- two pass: N too large for full-N column blocks -
        tile_d = 128 * min(lane_blocks, 4)
        per_elem_two = 4 * itemsize + 8
        tile_n = vmem_budget_bytes // (tile_d * per_elem_two)
        tile_n = max(8, min((tile_n // 8) * 8, 1024, ((N + 7) // 8) * 8))
        d_tiles = pl.cdiv(D, tile_d)
        n_tiles = pl.cdiv(N, tile_n)

        # Pass 1: per-feature f32 column sums (resident accumulator over N).
        sums = pl.pallas_call(
            functools.partial(_colsum_kernel, n_rows=N, tile_n=tile_n),
            out_shape=jax.ShapeDtypeStruct((1, D), jnp.float32),
            grid_spec=pltpu.PrefetchScalarGridSpec(
                num_scalar_prefetch=0,
                grid=(d_tiles, n_tiles),
                in_specs=[pl.BlockSpec((tile_n, tile_d), lambda j, i: (i, j))],
                out_specs=pl.BlockSpec((1, tile_d), lambda j, i: (0, j)),
            ),
            compiler_params=pltpu.CompilerParams(
                dimension_semantics=("parallel", "arbitrary"),
                vmem_limit_bytes=vmem_limit,
            ),
            cost_estimate=pl.CostEstimate(
                flops=N * D,
                transcendentals=0,
                bytes_accessed=N * D * itemsize + 4 * D,
            ),
        )(x2)

        # Pass 2: subtract the mean tile by tile.
        out = pl.pallas_call(
            functools.partial(_subtract_kernel, inv_n=inv_n),
            out_shape=jax.ShapeDtypeStruct((N, D), x2.dtype),
            grid_spec=pltpu.PrefetchScalarGridSpec(
                num_scalar_prefetch=0,
                grid=(n_tiles, d_tiles),
                in_specs=[pl.BlockSpec((tile_n, tile_d), lambda i, j: (i, j)),
                          pl.BlockSpec((1, tile_d), lambda i, j: (0, j))],
                out_specs=pl.BlockSpec((tile_n, tile_d), lambda i, j: (i, j)),
            ),
            compiler_params=pltpu.CompilerParams(
                dimension_semantics=("parallel", "parallel"),
                vmem_limit_bytes=vmem_limit,
            ),
            cost_estimate=pl.CostEstimate(
                flops=N * D,
                transcendentals=0,
                bytes_accessed=2 * N * D * itemsize + 4 * D,
            ),
        )(x2, sums)

    return out.reshape(orig_shape)


def _reference(x):
    xf = x.astype(jnp.float32)
    return (xf - jnp.mean(xf, axis=0, keepdims=True)).astype(x.dtype)


if __name__ == "__main__":
    key = jax.random.PRNGKey(0)
    k1, k2, k3, k4, k5 = jax.random.split(key, 5)

    # (input, forced vmem_budget_bytes or None)
    cases = [
        (jax.random.normal(k1, (8, 256), dtype=jnp.float32), None),   # aligned f32
        (jax.random.normal(k2, (8, 200), dtype=jnp.float32), None),   # ragged D (no pad/slice)
        (jax.random.normal(k3, (8, 384), dtype=jnp.float32).astype(jnp.bfloat16), None),
        (jax.random.normal(k4, (8, 96), dtype=jnp.float32), None),    # D < 128: exact block
        # Tiny forced budget exercises the large-N two-pass fallback path.
        (jax.random.normal(k5, (250, 256), dtype=jnp.float32), 64 * 1024),
    ]

    for x, budget in cases:
        out = jax.block_until_ready(l2_center_norm(x, vmem_budget_bytes=budget))
        ref = _reference(x)
        assert out.shape == ref.shape and out.dtype == ref.dtype
        if x.dtype == jnp.float32:
            atol = rtol = 1e-5
        else:
            atol = rtol = 2e-2
        assert jnp.allclose(out.astype(jnp.float32), ref.astype(jnp.float32),
                            atol=atol, rtol=rtol), f"mismatch for {x.shape} {x.dtype}"

    print("KERNEL_OK")
</pallas_src>

<mosaic_0001>
module attributes {stable_mosaic.version = 11 : i64} {
  func.func @_center_kernel(%arg0: i32, %arg1: memref<8x128xf32, #tpu.memory_space<vmem>>, %arg2: memref<8x128xf32, #tpu.memory_space<vmem>>) attributes {dimension_semantics = [#tpu.dimension_semantics<parallel>], iteration_bounds = array<i64: 2>, scalar_prefetch = 0 : i64, scratch_operands = 0 : i64, tpu.core_type = #tpu.core_type<tc>, window_params = [{transform_indices = @transform_0, window_bounds = array<i64: 8, 128>}, {transform_indices = @transform_1, window_bounds = array<i64: 8, 128>}]} {
    %c0 = arith.constant 0 : index
    %c0_0 = arith.constant 0 : index
    %0 = vector.load %arg1[%c0, %c0_0] : memref<8x128xf32, #tpu.memory_space<vmem>>, vector<8x128xf32>
    %cst = arith.constant dense<0.000000e+00> : vector<128xf32>
    %1 = vector.multi_reduction <add>, %0, %cst [0] : vector<8x128xf32> to vector<128xf32>
    %2 = vector.shape_cast %1 : vector<128xf32> to vector<1x128xf32>
    %cst_1 = arith.constant 1.250000e-01 : f32
    %3 = vector.broadcast %cst_1 : f32 to vector<1x128xf32>
    %4 = arith.mulf %2, %3 : vector<1x128xf32>
    %5 = vector.broadcast %4 : vector<1x128xf32> to vector<8x128xf32>
    %6 = arith.subf %0, %5 : vector<8x128xf32>
    %c0_2 = arith.constant 0 : index
    %c0_3 = arith.constant 0 : index
    %7 = vector.load %arg2[%c0_2, %c0_3] : memref<8x128xf32, #tpu.memory_space<vmem>>, vector<8x128xf32>
    tpu.vector_store %arg2[%c0_2, %c0_3], %6 {strides = array<i32>} : memref<8x128xf32, #tpu.memory_space<vmem>>, vector<8x128xf32>,
    return
  }
  func.func @transform_0(%arg0: i32) -> (i32, i32) {
    %c0_i32 = arith.constant 0 : i32
    %c0_i32_0 = arith.constant 0 : i32
    return %c0_i32, %arg0 : i32, i32
  }
  func.func @transform_1(%arg0: i32) -> (i32, i32) {
    %c0_i32 = arith.constant 0 : i32
    %c0_i32_0 = arith.constant 0 : i32
    return %c0_i32, %arg0 : i32, i32
  }
}

</mosaic_0001>

<llo_original>
// kernel: tpu_custom_call.1
$region0: #{tpu_custom_call.1}
  #allocation0 [shape = 'u32[]', space=smem, size = 0x4, offset = 0x4, fixed_abs, tag = 'smem constant byte address 0x4 - core index']
  #allocation1 [shape = 'u32[144,128]{1,0:T(1,128)}', space=vmem, size = 0x12000, scoped, tag = 'internal scratch']
  %s0 = inlined_call_operand.hbm [shape: f32[8,256], index: 0, kind: input, shape index: {}]
  %s1 = inlined_call_operand.hbm [shape: f32[8,256], index: 1, kind: output, shape index: {}]
  %s2 = sld [smem:[#allocation0]]
  $region41: #{tpu_custom_call.1} parent=0
    _
  %s4 = ssub.s32 1, %s2
  %s5 = scalar_select 0, %s4, %s2
  $region1: #{tpu_custom_call.1} parent=0
    #allocation2 [shape = 'u8[8192]{0}', space=vmem, size = 0x2000, scoped, tag = 'input window, operand 0']
    #allocation3 [shape = 's32[2]{0}', space=sflag, size = 0x8, scoped, tag = 'scoped memory for tpu_custom_call.1']
    #allocation4 [shape = 's32[2]{0}', space=sflag, size = 0x8, scoped, tag = 'scoped memory for tpu_custom_call.1']
    #allocation5 [shape = 'u8[8192]{0}', space=vmem, size = 0x2000, scoped, tag = 'output window, operand 0']
    %6 = vsyncpa [#allocation3], 0
    %s7 = scalar_lea.sflag [#allocation3], 1
    %8 = vsyncpa %s7, 0
    %9 = vsyncpa [#allocation4], 0
    %s10 = scalar_lea.sflag [#allocation4], 1
    %11 = vsyncpa %s10, 0
    loop: start=0, step=1, limit=4
    $region2: #{tpu_custom_call.1} parent=1 // loop_pre_header
      _
    $region3: #{tpu_custom_call.1} parent=1 // loop_header
      %s13 = sphi 0, %s17
      %p14 = scmp.ge.s32.totalorder %s13, 4
      %s23 = sphi 0, %s25
      %s26 = sphi 0, %s23
      %s27 = sphi 0, %s26
      %s43 = sphi 0, %s27
      %s49 = sphi 0, %s51
      %s52 = sphi 0, %s49
      %s53 = sphi 0, %s52
      %s69 = sphi 0, %s53
    $region4: #{tpu_custom_call.1} parent=1 // loop_header_branch
      %16 = sbr.rel (%p14) target = $region8
    $region5: #{tpu_custom_call.1} parent=1 // loop_body
      %s18 = ssub.s32 %s13, 1
      %s19 = ssub.s32 %s13, 2
      %s20 = sadd.s32 %s13, 1
      %s21 = ssub.s32 %s13, %s20
      %p22 = scmp.eq.s32.totalorder %s21, 0
      %s24 = sadd.s32 %s23, 1
      %s25 = scalar_select %p22, %s23, %s24
      %p28 = pneg %p22
      %p29 = scmp.eq.s32.totalorder %s13, 1
      %p30 = por %p28, %p29
      %p31 = scmp.ne.s32.totalorder %s23, %s26
      %p32 = scmp.eq.s32.totalorder %s13, 0
      %p33 = por %p31, %p32
      %p34 = scmp.ne.s32.totalorder %s23, %s26
      %p35 = scmp.eq.s32.totalorder %s18, 1
      %p36 = por %p34, %p35
      %p37 = scmp.ne.s32.totalorder %s26, %s27
      %p38 = scmp.eq.s32.totalorder %s18, 0
      %p39 = por %p37, %p38
      %p40 = scmp.ne.s32.totalorder %s26, %s27
      %p41 = scmp.eq.s32.totalorder %s19, 1
      %p42 = por %p40, %p41
      %p44 = scmp.ne.s32.totalorder %s27, %s43
      %p45 = scmp.eq.s32.totalorder %s19, 0
      %p46 = por %p44, %p45
      %s47 = ssub.s32 %s13, %s20
      %p48 = scmp.eq.s32.totalorder %s47, 0
      %s50 = sadd.s32 %s49, 1
      %s51 = scalar_select %p48, %s49, %s50
      %p54 = pneg %p48
      %p55 = scmp.eq.s32.totalorder %s13, 1
      %p56 = por %p54, %p55
      %p57 = scmp.ne.s32.totalorder %s49, %s52
      %p58 = scmp.eq.s32.totalorder %s13, 0
      %p59 = por %p57, %p58
      %p60 = scmp.ne.s32.totalorder %s49, %s52
      %p61 = scmp.eq.s32.totalorder %s18, 1
      %p62 = por %p60, %p61
      %p63 = scmp.ne.s32.totalorder %s52, %s53
      %p64 = scmp.eq.s32.totalorder %s18, 0
      %p65 = por %p63, %p64
      %p66 = scmp.ne.s32.totalorder %s52, %s53
      %p67 = scmp.eq.s32.totalorder %s19, 1
      %p68 = por %p66, %p67
      %p70 = scmp.ne.s32.totalorder %s53, %s69
      %p71 = scmp.eq.s32.totalorder %s19, 0
      %p72 = por %p70, %p71
      %p73 = scmp.le.s32.totalorder 1, %s13
      %p74 = scmp.lt.s32.totalorder %s13, 3
      %p75 = pnand %p73, %p74
      %p76 = pneg %p75
      // Predicated region
      $region9: #{tpu_custom_call.1} parent=5 // pred_check
        _
      $region10: #{tpu_custom_call.1} parent=5 // pred_check_branch
        %78 = sbr.rel (%p75) target = $region12
      $region11: #{tpu_custom_call.1} parent=5 // pred_region
        %s79 = ssub.s32 %s13, 1
      $region12: #{tpu_custom_call.1} parent=5 // pred_fallthru
        _
      %p80 = scmp.lt.s32.totalorder %s13, 2
      // Predicated region
      $region13: #{tpu_custom_call.1} parent=5 // pred_check
        %p81 = pneg %p80
      $region14: #{tpu_custom_call.1} parent=5 // pred_check_branch
        %83 = sbr.rel (%p81) target = $region16
      $region15: #{tpu_custom_call.1} parent=5 // pred_region
        // Predicated region
        $region17: #{tpu_custom_call.1} parent=15 // pred_check
          %p84 = pneg %p33
        $region18: #{tpu_custom_call.1} parent=15 // pred_check_branch
          %86 = sbr.rel (%p84) target = $region20
        $region19: #{tpu_custom_call.1} parent=15 // pred_region
          %s87 = sand.u32 %s23, 1
          %s88 = scalar_lea.sflag [#allocation3], %s87
          %s89 = sand.u32 %s23, 1
          %s90 = smul.addr %s89, 8
          %s91 = scalar_lea.vmem [#allocation2], %s90
          %s93 = ssub.s32 128, 128
          %94 = vsyncadd %s88, %s93
          %s95 = smul.addr %s13, 128
          %s96 = scalar_lea.hbm %s0, %s95
          %s98 = sshll.u32 %s91, 4
          %s99 = int_to_ptr.vmem [resolvable:$true] %s98
          %101 = dma.hbm_to_vmem [thread:$0]  %s96, 128, %s99, %s88
        $region20: #{tpu_custom_call.1} parent=15 // pred_fallthru
          _
      $region16: #{tpu_custom_call.1} parent=5 // pred_fallthru
        _
      %p102 = scmp.le.s32.totalorder 1, %s13
      %p103 = scmp.lt.s32.totalorder %s13, 3
      %p104 = pnand %p102, %p103
      %p105 = pneg %p104
      // Predicated region
      $region21: #{tpu_custom_call.1} parent=5 // pred_check
        _
      $region22: #{tpu_custom_call.1} parent=5 // pred_check_branch
        %107 = sbr.rel (%p104) target = $region24
      $region23: #{tpu_custom_call.1} parent=5 // pred_region
        %s108 = ssub.s32 %s13, 1
        %s109 = sand.u32 %s26, 1
        %s110 = scalar_lea.sflag [#allocation3], %s109
        %s111 = sand.u32 %s26, 1
        %s112 = smul.addr %s111, 8
        %s113 = scalar_lea.vmem [#allocation2], %s112
        // Predicated region
        $region25: #{tpu_custom_call.1} parent=23 // pred_check
          %p114 = pneg %p39
        $region26: #{tpu_custom_call.1} parent=23 // pred_check_branch
          %116 = sbr.rel (%p114) target = $region28
        $region27: #{tpu_custom_call.1} parent=23 // pred_region
          %117 = dma.done %s110, 128
        $region28: #{tpu_custom_call.1} parent=23 // pred_fallthru
          _
        %s118 = sand.u32 %s26, 1
        %s119 = scalar_lea.sflag [#allocation3], %s118
        %s120 = sand.u32 %s26, 1
        %s121 = smul.addr %s120, 8
        %s122 = scalar_lea.vmem [#allocation2], %s121
        %p123 = pneg %p39
        %p124 = pneg %p36
        %p125 = pneg %p65
        %p126 = pneg %p62
        %s127 = sand.u32 %s52, 1
        %s128 = scalar_lea.sflag [#allocation4], %s127
        %s129 = sand.u32 %s52, 1
        %s130 = smul.addr %s129, 8
        %s131 = scalar_lea.vmem [#allocation5], %s130
        %v132 = vld [vmem:[%s113] sm:$0xff]
        %v133 = vrot.slane %v132, 4
        %v134 = vadd.f32 %v132, %v133
        %v135 = vrot.slane %v134, 2
        %v136 = vadd.f32 %v134, %v135
        %v137 = vrot.slane %v136, 1
        %v138 = vadd.f32 %v136, %v137
        %v139 = vmul.f32 %v138, 0.125
        %v140 = vsub.f32 %v132, %v139
        %141 = vst [vmem:[%s131] sm:$0xff] %v140
        %s142 = sand.u32 %s52, 1
        %s143 = scalar_lea.sflag [#allocation4], %s142
        %s144 = sand.u32 %s52, 1
        %s145 = smul.addr %s144, 8
        %s146 = scalar_lea.vmem [#allocation5], %s145
        // Predicated region
        $region29: #{tpu_custom_call.1} parent=23 // pred_check
          %p147 = pneg %p62
        $region30: #{tpu_custom_call.1} parent=23 // pred_check_branch
          %149 = sbr.rel (%p147) target = $region32
        $region31: #{tpu_custom_call.1} parent=23 // pred_region
          %s151 = ssub.s32 128, 128
          %152 = vsyncadd %s143, %s151
          %s153 = smul.addr %s18, 128
          %s154 = scalar_lea.hbm %s1, %s153
          %s156 = sshll.u32 %s146, 4
          %s157 = int_to_ptr.vmem [resolvable:$true] %s156
          %159 = dma.vmem_to_hbm [thread:$0]  %s157, 128, %s154, %s143
        $region32: #{tpu_custom_call.1} parent=23 // pred_fallthru
          _
      $region24: #{tpu_custom_call.1} parent=5 // pred_fallthru
        _
      %p160 = scmp.le.s32.totalorder 2, %s13
      // Predicated region
      $region33: #{tpu_custom_call.1} parent=5 // pred_check
        %p161 = pneg %p160
      $region34: #{tpu_custom_call.1} parent=5 // pred_check_branch
        %163 = sbr.rel (%p161) target = $region36
      $region35: #{tpu_custom_call.1} parent=5 // pred_region
        %s164 = ssub.s32 %s13, 2
        // Predicated region
        $region37: #{tpu_custom_call.1} parent=35 // pred_check
          %p165 = pneg %p68
        $region38: #{tpu_custom_call.1} parent=35 // pred_check_branch
          %167 = sbr.rel (%p165) target = $region40
        $region39: #{tpu_custom_call.1} parent=35 // pred_region
          %s168 = sand.u32 %s53, 1
          %s169 = scalar_lea.sflag [#allocation4], %s168
          %s170 = sand.u32 %s53, 1
          %s171 = smul.addr %s170, 8
          %s172 = scalar_lea.vmem [#allocation5], %s171
          %173 = dma.done %s169, 128
        $region40: #{tpu_custom_call.1} parent=35 // pred_fallthru
          _
      $region36: #{tpu_custom_call.1} parent=5 // pred_fallthru
        _
    $region6: #{tpu_custom_call.1} parent=1 // loop_footer
      %s17 = sadd.s32 1, %s13
    $region7: #{tpu_custom_call.1} parent=1 // loop_footer_branch
      %12 = sbr.rel target = $region3
    $region8: #{tpu_custom_call.1} parent=1 // loop_exit
      _
    %174 = vsyncpa [#allocation3], 1
    %s175 = scalar_lea.sflag [#allocation3], 1
    %176 = vsyncpa %s175, 1
    %177 = vsyncpa [#allocation4], 1
    %s178 = scalar_lea.sflag [#allocation4], 1
    %179 = vsyncpa %s178, 1

</llo_original>
